<compile_context>
chip_gen: v7x
topology: tpu7x:2x2x1
jax: 0.10.0
libtpu: 0.0.40
codegen_flags: <defaults>
</compile_context>

<pallas_src>
import functools

import jax
import jax.numpy as jnp
from jax.experimental import pallas as pl
from jax.experimental.pallas import tpu as pltpu

LN_EPS = 1e-5      # PyTorch nn.LayerNorm default
MAX_TILE_B = 512   # batch rows per grid step (sweet spot on measured roofline data)
LANE = 128


def _round_up(n, m):
    return ((n + m - 1) // m) * m


def _layernorm(x, gamma, beta, inv_n):
    # Masked LayerNorm over lane-padded activations:
    #   * padded lanes of x are exactly 0 (zero-padded weights/biases), so sum(x)
    #     and sum(x*x) over the padded width equal the sums over the true width;
    #   * inv_n = 1/true_width gives the PyTorch population statistics;
    #   * gamma/beta are zero in padded lanes, so padded lanes come out as 0 again.
    # sum(x) and sum(x*x) are independent -> the two XLU reductions can overlap.
    s1 = jnp.sum(x, axis=-1, keepdims=True)
    s2 = jnp.sum(x * x, axis=-1, keepdims=True)
    mu = s1 * inv_n
    var = s2 * inv_n - mu * mu
    return (x - mu) * jax.lax.rsqrt(var + LN_EPS) * gamma + beta


def _make_critic_kernel(h0_true, h1_true):
    inv_h0 = 1.0 / float(h0_true)
    inv_h1 = 1.0 / float(h1_true)

    def kernel(x_ref, w1_ref, w2s_ref, w2a_ref, vecs_ref, out_ref):
        h0p = w1_ref.shape[1]   # lane-padded hidden dims
        h1p = w2s_ref.shape[1]

        # Packed per-feature vectors, one sublane each (rows of the (8, HMAX) block):
        #   0:b1  1:g1  2:be1  3:b2  4:g2  5:be2  6:w3^T  7:b3 (at lane 0)
        b1, g1, be1 = vecs_ref[0:1, :h0p], vecs_ref[1:2, :h0p], vecs_ref[2:3, :h0p]
        b2, g2, be2 = vecs_ref[3:4, :h1p], vecs_ref[4:5, :h1p], vecs_ref[5:6, :h1p]
        w3_row = vecs_ref[6:7, :h1p]
        b3 = vecs_ref[7:8, 0:1]

        x = x_ref[...]   # (tile_b, k_pad) bf16, lanes = [state | action | zeros]

        # ---- state branch: Linear -> ReLU -> LayerNorm (full-depth K=128 MXU pass) ---
        h = jnp.dot(x, w1_ref[...], preferred_element_type=jnp.float32) + b1
        h = jnp.maximum(h, 0.0)
        h = _layernorm(h, g1, be1, inv_h0)

        # ---- q-head layer: Linear(concat) -> ReLU -> LayerNorm ------------------------
        # concat matmul split as h @ W2[:h0] + action @ W2[h0:]; the action term reuses
        # the fused input x against a row-zero-padded W2a (so it is also a full K pass).
        z = (jnp.dot(h.astype(jnp.bfloat16), w2s_ref[...],
                     preferred_element_type=jnp.float32)
             + jnp.dot(x, w2a_ref[...], preferred_element_type=jnp.float32)
             + b2)
        z = jnp.maximum(z, 0.0)
        z = _layernorm(z, g2, be2, inv_h1)

        # ---- final Linear(h1 -> 1): transpose-free VPU mul + XLU lane-reduce, f32 -----
        q = jnp.sum(z * w3_row, axis=-1, keepdims=True) + b3   # (tile_b, 1)
        out_ref[...] = q.astype(out_ref.dtype)

    return kernel


def pack_params(params):
    """One-time padding/packing of the target-net parameters for the kernel.

    Returns (packed_arrays, (h0_true, h1_true)).  Hidden/feature dims are padded to
    128-lane multiples with zeros; gamma/beta padded with zeros so the masked
    LayerNorm in-kernel leaves padded lanes at exactly 0.
    """
    state_dim, h0 = params["w1"].shape
    action_dim = params["w2a"].shape[0]
    h1 = params["w2s"].shape[1]

    k_pad = _round_up(state_dim + action_dim, LANE)
    h0_pad = _round_up(h0, LANE)
    h1_pad = _round_up(h1, LANE)
    hmax = max(h0_pad, h1_pad)

    w1 = jnp.zeros((k_pad, h0_pad), jnp.float32).at[:state_dim, :h0].set(
        params["w1"].astype(jnp.float32))
    w2s = jnp.zeros((h0_pad, h1_pad), jnp.float32).at[:h0, :h1].set(
        params["w2s"].astype(jnp.float32))
    w2a = jnp.zeros((k_pad, h1_pad), jnp.float32).at[
        state_dim:state_dim + action_dim, :h1].set(params["w2a"].astype(jnp.float32))

    def row(v):
        v = jnp.asarray(v, jnp.float32).reshape(1, -1)
        return jnp.pad(v, ((0, 0), (0, hmax - v.shape[1])))

    vecs = jnp.concatenate([
        row(params["b1"]), row(params["g1"]), row(params["be1"]),
        row(params["b2"]), row(params["g2"]), row(params["be2"]),
        row(params["w3"][:, 0]),            # w3 column as a row (row 6)
        row(params["b3"]),                  # b3 scalar at [7, 0]
    ], axis=0)                              # (8, hmax) f32

    packed = {
        "w1": w1.astype(jnp.bfloat16),
        "w2s": w2s.astype(jnp.bfloat16),
        "w2a": w2a.astype(jnp.bfloat16),
        "vecs": vecs,
    }
    return packed, (h0, h1)


@functools.partial(jax.jit, static_argnums=(3,))
def target_critic_forward(state, action, packed, dims):
    """Target critic forward pass as a batch-tiled Pallas kernel. Returns (B, 1)."""
    h0_true, h1_true = dims
    B, state_dim = state.shape
    action_dim = action.shape[1]

    k_pad = packed["w1"].shape[0]
    h0_pad = packed["w1"].shape[1]
    h1_pad = packed["w2s"].shape[1]
    hmax = packed["vecs"].shape[1]

    # Adaptive batch tile: small batches use a single 8-aligned tile (no big pad pass);
    # large batches use 512-row tiles (several grid steps -> both v7x TCs get work via
    # the "parallel" batch axis).
    tile_b = min(MAX_TILE_B, _round_up(B, 8))
    b_pad = _round_up(B, tile_b)
    num_tiles = b_pad // tile_b

    # Fused input: [state | action | zero lanes] padded to k_pad lanes; concat + pad +
    # bf16 cast fuse into the single producer of the kernel's input operand.
    x = jnp.concatenate([state, action], axis=1)
    x = jnp.pad(x, ((0, b_pad - B), (0, k_pad - (state_dim + action_dim))))
    x = x.astype(jnp.bfloat16)

    in_specs = [
        pl.BlockSpec((tile_b, k_pad), lambda i: (i, 0)),    # fused state|action, tiled
        pl.BlockSpec((k_pad, h0_pad), lambda i: (0, 0)),    # weights: VMEM-resident
        pl.BlockSpec((h0_pad, h1_pad), lambda i: (0, 0)),
        pl.BlockSpec((k_pad, h1_pad), lambda i: (0, 0)),
        pl.BlockSpec((8, hmax), lambda i: (0, 0)),          # packed bias/LN/w3 block
    ]
    out_specs = pl.BlockSpec((tile_b, 1), lambda i: (i, 0))

    q = pl.pallas_call(
        _make_critic_kernel(h0_true, h1_true),
        grid=(num_tiles,),
        in_specs=in_specs,
        out_specs=out_specs,
        out_shape=jax.ShapeDtypeStruct((b_pad, 1), jnp.float32),
        compiler_params=pltpu.CompilerParams(
            dimension_semantics=("parallel",)),   # shard batch tiles across TCs (v7x)
    )(x, packed["w1"], packed["w2s"], packed["w2a"], packed["vecs"])

    return q[:B]


def init_params(key, state_dim, action_dim, hidden_dims):
    """Deterministic PyTorch-style init (uniform +/- 1/sqrt(fan_in)).

    The target network is a deepcopy of the online network, so one parameter set
    serves as both; forward() always uses the target copy.
    """
    h0, h1 = hidden_dims
    ks = jax.random.split(key, 3)

    def lin(k, fan_in, fan_out):
        bound = 1.0 / jnp.sqrt(fan_in)
        kw, kb = jax.random.split(k)
        w = jax.random.uniform(kw, (fan_in, fan_out), jnp.float32, -bound, bound)
        b = jax.random.uniform(kb, (1, fan_out), jnp.float32, -bound, bound)
        return w, b

    w1, b1 = lin(ks[0], state_dim, h0)
    w2, b2 = lin(ks[1], h0 + action_dim, h1)
    w3, b3 = lin(ks[2], h1, 1)

    return {
        "w1": w1, "b1": b1,
        "g1": jnp.ones((1, h0), jnp.float32), "be1": jnp.zeros((1, h0), jnp.float32),
        # split W2 rows: state-feature part vs action part (equivalent to concat)
        "w2s": w2[:h0], "w2a": w2[h0:], "b2": b2,
        "g2": jnp.ones((1, h1), jnp.float32), "be2": jnp.zeros((1, h1), jnp.float32),
        "w3": w3, "b3": b3,
    }


def _reference_forward(state, action, p):
    """Pure-JAX f32 reference of CriticNetwork.forward for a sanity check."""
    def ln(x, g, b):
        mu = jnp.mean(x, axis=-1, keepdims=True)
        var = jnp.mean((x - mu) ** 2, axis=-1, keepdims=True)
        return (x - mu) * jax.lax.rsqrt(var + LN_EPS) * g + b
    h = jnp.maximum(state @ p["w1"] + p["b1"], 0.0)
    h = ln(h, p["g1"], p["be1"])
    c = jnp.concatenate([h, action], axis=1)
    w2 = jnp.concatenate([p["w2s"], p["w2a"]], axis=0)
    z = jnp.maximum(c @ w2 + p["b2"], 0.0)
    z = ln(z, p["g2"], p["be2"])
    return z @ p["w3"] + p["b3"]


if __name__ == "__main__":
    # Small, deliberately lane-unaligned shapes to exercise the pad + masked-LN path
    # (the PyTorch default [400, 300] goes through exactly the same code).
    B, STATE_DIM, ACTION_DIM = 8, 12, 6
    HIDDEN_DIMS = [100, 72]

    key = jax.random.PRNGKey(0)
    k_state, k_action, k_params = jax.random.split(key, 3)

    state = jax.random.normal(k_state, (B, STATE_DIM), jnp.float32)
    action = jax.random.normal(k_action, (B, ACTION_DIM), jnp.float32)
    params = init_params(k_params, STATE_DIM, ACTION_DIM, HIDDEN_DIMS)

    packed, dims = pack_params(params)          # one-time pad/pack of the target params
    q = target_critic_forward(state, action, packed, dims)
    q = jax.block_until_ready(q)

    q_ref = _reference_forward(state, action, params)
    assert q.shape == (B, 1)
    # bf16 matmul operands vs f32 reference => ~1e-2-scale deviation is expected.
    assert jnp.allclose(q, q_ref, atol=5e-2, rtol=5e-2), float(jnp.max(jnp.abs(q - q_ref)))

    print("KERNEL_OK")
</pallas_src>

<mosaic_0001>
module attributes {stable_mosaic.version = 11 : i64} {
  func.func @kernel(%arg0: i32, %arg1: memref<8x128xbf16, #tpu.memory_space<vmem>>, %arg2: memref<128x128xbf16, #tpu.memory_space<vmem>>, %arg3: memref<128x128xbf16, #tpu.memory_space<vmem>>, %arg4: memref<128x128xbf16, #tpu.memory_space<vmem>>, %arg5: memref<8x128xf32, #tpu.memory_space<vmem>>, %arg6: memref<8x1xf32, #tpu.memory_space<vmem>>) attributes {dimension_semantics = [#tpu.dimension_semantics<parallel>], iteration_bounds = array<i64: 1>, scalar_prefetch = 0 : i64, scratch_operands = 0 : i64, tpu.core_type = #tpu.core_type<tc>, window_params = [{transform_indices = @transform_0, window_bounds = array<i64: 8, 128>}, {pipeline_mode = #tpu.pipeline_mode<synchronous>, transform_indices = @transform_1, window_bounds = array<i64: 128, 128>}, {pipeline_mode = #tpu.pipeline_mode<synchronous>, transform_indices = @transform_2, window_bounds = array<i64: 128, 128>}, {pipeline_mode = #tpu.pipeline_mode<synchronous>, transform_indices = @transform_3, window_bounds = array<i64: 128, 128>}, {pipeline_mode = #tpu.pipeline_mode<synchronous>, transform_indices = @transform_4, window_bounds = array<i64: 8, 128>}, {transform_indices = @transform_5, window_bounds = array<i64: 8, 1>}]} {
    %c0 = arith.constant 0 : index
    %c0_0 = arith.constant 0 : index
    %0 = vector.load %arg5[%c0, %c0_0] : memref<8x128xf32, #tpu.memory_space<vmem>>, vector<1x128xf32>
    %c1 = arith.constant 1 : index
    %c0_1 = arith.constant 0 : index
    %1 = vector.load %arg5[%c1, %c0_1] : memref<8x128xf32, #tpu.memory_space<vmem>>, vector<1x128xf32>
    %c2 = arith.constant 2 : index
    %c0_2 = arith.constant 0 : index
    %2 = vector.load %arg5[%c2, %c0_2] : memref<8x128xf32, #tpu.memory_space<vmem>>, vector<1x128xf32>
    %c3 = arith.constant 3 : index
    %c0_3 = arith.constant 0 : index
    %3 = vector.load %arg5[%c3, %c0_3] : memref<8x128xf32, #tpu.memory_space<vmem>>, vector<1x128xf32>
    %c4 = arith.constant 4 : index
    %c0_4 = arith.constant 0 : index
    %4 = vector.load %arg5[%c4, %c0_4] : memref<8x128xf32, #tpu.memory_space<vmem>>, vector<1x128xf32>
    %c5 = arith.constant 5 : index
    %c0_5 = arith.constant 0 : index
    %5 = vector.load %arg5[%c5, %c0_5] : memref<8x128xf32, #tpu.memory_space<vmem>>, vector<1x128xf32>
    %c6 = arith.constant 6 : index
    %c0_6 = arith.constant 0 : index
    %6 = vector.load %arg5[%c6, %c0_6] : memref<8x128xf32, #tpu.memory_space<vmem>>, vector<1x128xf32>
    %c7 = arith.constant 7 : index
    %c0_7 = arith.constant 0 : index
    %7 = vector.load %arg5[%c7, %c0_7] : memref<8x128xf32, #tpu.memory_space<vmem>>, vector<1x1xf32>
    %c0_8 = arith.constant 0 : index
    %c0_9 = arith.constant 0 : index
    %8 = vector.load %arg1[%c0_8, %c0_9] : memref<8x128xbf16, #tpu.memory_space<vmem>>, vector<8x128xbf16>
    %c0_10 = arith.constant 0 : index
    %c0_11 = arith.constant 0 : index
    %9 = vector.load %arg2[%c0_10, %c0_11] : memref<128x128xbf16, #tpu.memory_space<vmem>>, vector<128x128xbf16>
    %cst = arith.constant dense<0.000000e+00> : vector<8x128xf32>
    %10 = tpu.matmul %8, %9, %cst {dimension_numbers = #tpu.dot_dimension_numbers<[1], [0], [0], [1], [0, 0, 1, 1], [], []>} : vector<8x128xbf16>, vector<128x128xbf16>, vector<8x128xf32> -> vector<8x128xf32>
    %11 = vector.broadcast %0 : vector<1x128xf32> to vector<8x128xf32>
    %12 = arith.addf %10, %11 : vector<8x128xf32>
    %cst_12 = arith.constant 0.000000e+00 : f32
    %13 = vector.broadcast %cst_12 : f32 to vector<8x128xf32>
    %14 = arith.maximumf %12, %13 : vector<8x128xf32>
    %cst_13 = arith.constant dense<0.000000e+00> : vector<8xf32>
    %15 = vector.multi_reduction <add>, %14, %cst_13 [1] : vector<8x128xf32> to vector<8xf32>
    %16 = vector.shape_cast %15 : vector<8xf32> to vector<8x1xf32>
    %17 = arith.mulf %14, %14 : vector<8x128xf32>
    %cst_14 = arith.constant dense<0.000000e+00> : vector<8xf32>
    %18 = vector.multi_reduction <add>, %17, %cst_14 [1] : vector<8x128xf32> to vector<8xf32>
    %19 = vector.shape_cast %18 : vector<8xf32> to vector<8x1xf32>
    %cst_15 = arith.constant 0.00999999977 : f32
    %20 = vector.broadcast %cst_15 : f32 to vector<8x1xf32>
    %21 = arith.mulf %16, %20 : vector<8x1xf32>
    %cst_16 = arith.constant 0.00999999977 : f32
    %22 = vector.broadcast %cst_16 : f32 to vector<8x1xf32>
    %23 = arith.mulf %19, %22 : vector<8x1xf32>
    %24 = arith.mulf %21, %21 : vector<8x1xf32>
    %25 = arith.subf %23, %24 : vector<8x1xf32>
    %26 = vector.broadcast %21 : vector<8x1xf32> to vector<8x128xf32>
    %27 = arith.subf %14, %26 : vector<8x128xf32>
    %cst_17 = arith.constant 9.99999974E-6 : f32
    %28 = vector.broadcast %cst_17 : f32 to vector<8x1xf32>
    %29 = arith.addf %25, %28 : vector<8x1xf32>
    %30 = math.rsqrt %29 : vector<8x1xf32>
    %31 = vector.broadcast %30 : vector<8x1xf32> to vector<8x128xf32>
    %32 = arith.mulf %27, %31 : vector<8x128xf32>
    %33 = vector.broadcast %1 : vector<1x128xf32> to vector<8x128xf32>
    %34 = arith.mulf %32, %33 : vector<8x128xf32>
    %35 = vector.broadcast %2 : vector<1x128xf32> to vector<8x128xf32>
    %36 = arith.addf %34, %35 : vector<8x128xf32>
    %37 = arith.truncf %36 : vector<8x128xf32> to vector<8x128xbf16>
    %c0_18 = arith.constant 0 : index
    %c0_19 = arith.constant 0 : index
    %38 = vector.load %arg3[%c0_18, %c0_19] : memref<128x128xbf16, #tpu.memory_space<vmem>>, vector<128x128xbf16>
    %cst_20 = arith.constant dense<0.000000e+00> : vector<8x128xf32>
    %39 = tpu.matmul %37, %38, %cst_20 {dimension_numbers = #tpu.dot_dimension_numbers<[1], [0], [0], [1], [0, 0, 1, 1], [], []>} : vector<8x128xbf16>, vector<128x128xbf16>, vector<8x128xf32> -> vector<8x128xf32>
    %c0_21 = arith.constant 0 : index
    %c0_22 = arith.constant 0 : index
    %40 = vector.load %arg4[%c0_21, %c0_22] : memref<128x128xbf16, #tpu.memory_space<vmem>>, vector<128x128xbf16>
    %cst_23 = arith.constant dense<0.000000e+00> : vector<8x128xf32>
    %41 = tpu.matmul %8, %40, %cst_23 {dimension_numbers = #tpu.dot_dimension_numbers<[1], [0], [0], [1], [0, 0, 1, 1], [], []>} : vector<8x128xbf16>, vector<128x128xbf16>, vector<8x128xf32> -> vector<8x128xf32>
    %42 = arith.addf %39, %41 : vector<8x128xf32>
    %43 = vector.broadcast %3 : vector<1x128xf32> to vector<8x128xf32>
    %44 = arith.addf %42, %43 : vector<8x128xf32>
    %cst_24 = arith.constant 0.000000e+00 : f32
    %45 = vector.broadcast %cst_24 : f32 to vector<8x128xf32>
    %46 = arith.maximumf %44, %45 : vector<8x128xf32>
    %cst_25 = arith.constant dense<0.000000e+00> : vector<8xf32>
    %47 = vector.multi_reduction <add>, %46, %cst_25 [1] : vector<8x128xf32> to vector<8xf32>
    %48 = vector.shape_cast %47 : vector<8xf32> to vector<8x1xf32>
    %49 = arith.mulf %46, %46 : vector<8x128xf32>
    %cst_26 = arith.constant dense<0.000000e+00> : vector<8xf32>
    %50 = vector.multi_reduction <add>, %49, %cst_26 [1] : vector<8x128xf32> to vector<8xf32>
    %51 = vector.shape_cast %50 : vector<8xf32> to vector<8x1xf32>
    %cst_27 = arith.constant 0.013888889 : f32
    %52 = vector.broadcast %cst_27 : f32 to vector<8x1xf32>
    %53 = arith.mulf %48, %52 : vector<8x1xf32>
    %cst_28 = arith.constant 0.013888889 : f32
    %54 = vector.broadcast %cst_28 : f32 to vector<8x1xf32>
    %55 = arith.mulf %51, %54 : vector<8x1xf32>
    %56 = arith.mulf %53, %53 : vector<8x1xf32>
    %57 = arith.subf %55, %56 : vector<8x1xf32>
    %58 = vector.broadcast %53 : vector<8x1xf32> to vector<8x128xf32>
    %59 = arith.subf %46, %58 : vector<8x128xf32>
    %cst_29 = arith.constant 9.99999974E-6 : f32
    %60 = vector.broadcast %cst_29 : f32 to vector<8x1xf32>
    %61 = arith.addf %57, %60 : vector<8x1xf32>
    %62 = math.rsqrt %61 : vector<8x1xf32>
    %63 = vector.broadcast %62 : vector<8x1xf32> to vector<8x128xf32>
    %64 = arith.mulf %59, %63 : vector<8x128xf32>
    %65 = vector.broadcast %4 : vector<1x128xf32> to vector<8x128xf32>
    %66 = arith.mulf %64, %65 : vector<8x128xf32>
    %67 = vector.broadcast %5 : vector<1x128xf32> to vector<8x128xf32>
    %68 = arith.addf %66, %67 : vector<8x128xf32>
    %69 = vector.broadcast %6 : vector<1x128xf32> to vector<8x128xf32>
    %70 = arith.mulf %68, %69 : vector<8x128xf32>
    %cst_30 = arith.constant dense<0.000000e+00> : vector<8xf32>
    %71 = vector.multi_reduction <add>, %70, %cst_30 [1] : vector<8x128xf32> to vector<8xf32>
    %72 = vector.shape_cast %71 : vector<8xf32> to vector<8x1xf32>
    %73 = vector.broadcast %7 : vector<1x1xf32> to vector<8x1xf32>
    %74 = arith.addf %72, %73 : vector<8x1xf32>
    %c0_31 = arith.constant 0 : index
    %c0_32 = arith.constant 0 : index
    %75 = vector.load %arg6[%c0_31, %c0_32] : memref<8x1xf32, #tpu.memory_space<vmem>>, vector<8x1xf32>
    tpu.vector_store %arg6[%c0_31, %c0_32], %74 {strides = array<i32>} : memref<8x1xf32, #tpu.memory_space<vmem>>, vector<8x1xf32>,
    return
  }
  func.func @transform_0(%arg0: i32) -> (i32, i32) {
    %c0_i32 = arith.constant 0 : i32
    %c0_i32_0 = arith.constant 0 : i32
    return %arg0, %c0_i32 : i32, i32
  }
  func.func @transform_1(%arg0: i32) -> (i32, i32) {
    %c0_i32 = arith.constant 0 : i32
    %c0_i32_0 = arith.constant 0 : i32
    %c0_i32_1 = arith.constant 0 : i32
    return %c0_i32, %c0_i32_0 : i32, i32
  }
  func.func @transform_2(%arg0: i32) -> (i32, i32) {
    %c0_i32 = arith.constant 0 : i32
    %c0_i32_0 = arith.constant 0 : i32
    %c0_i32_1 = arith.constant 0 : i32
    return %c0_i32, %c0_i32_0 : i32, i32
  }
  func.func @transform_3(%arg0: i32) -> (i32, i32) {
    %c0_i32 = arith.constant 0 : i32
    %c0_i32_0 = arith.constant 0 : i32
    %c0_i32_1 = arith.constant 0 : i32
    return %c0_i32, %c0_i32_0 : i32, i32
  }
  func.func @transform_4(%arg0: i32) -> (i32, i32) {
    %c0_i32 = arith.constant 0 : i32
    %c0_i32_0 = arith.constant 0 : i32
    %c0_i32_1 = arith.constant 0 : i32
    return %c0_i32, %c0_i32_0 : i32, i32
  }
  func.func @transform_5(%arg0: i32) -> (i32, i32) {
    %c0_i32 = arith.constant 0 : i32
    %c0_i32_0 = arith.constant 0 : i32
    return %arg0, %c0_i32 : i32, i32
  }
}

</mosaic_0001>

<llo_original>
// kernel: target_critic_forward.1
$region0: #{target_critic_forward.1}
  #allocation0 [shape = 'u32[]', space=smem, size = 0x4, offset = 0x4, fixed_abs, tag = 'smem constant byte address 0x4 - core index']
  #allocation1 [shape = 'u32[144,128]{1,0:T(1,128)}', space=vmem, size = 0x12000, scoped, tag = 'internal scratch']
  %s0 = inlined_call_operand.vmem [shape: bf16[8,128], index: 0, kind: input, shape index: {}]
  %s1 = inlined_call_operand.hbm [shape: bf16[128,128], index: 1, kind: input, shape index: {}]
  %s2 = inlined_call_operand.hbm [shape: bf16[128,128], index: 2, kind: input, shape index: {}]
  %s3 = inlined_call_operand.hbm [shape: bf16[128,128], index: 3, kind: input, shape index: {}]
  %s4 = inlined_call_operand.vmem [shape: f32[8,128], index: 4, kind: input, shape index: {}]
  %s5 = inlined_call_operand.vmem [shape: f32[8,1], index: 5, kind: output, shape index: {}]
  %s6 = sld [smem:[#allocation0]]
  $region42: #{target_critic_forward.1} parent=0
    _
  %s8 = ssub.s32 1, %s6
  %s9 = scalar_select 0, %s8, %s6
  $region1: #{target_critic_forward.1} parent=0
    #allocation2 [shape = 'u8[32768]{0}', space=vmem, size = 0x8000, scoped, tag = 'input window, operand 1, single buffered']
    #allocation3 [shape = 's32[1]{0}', space=sflag, size = 0x4, scoped, tag = 'scoped memory for target_critic_forward.1']
    #allocation4 [shape = 'u8[32768]{0}', space=vmem, size = 0x8000, scoped, tag = 'input window, operand 2, single buffered']
    #allocation5 [shape = 's32[1]{0}', space=sflag, size = 0x4, scoped, tag = 'scoped memory for target_critic_forward.1']
    #allocation6 [shape = 'u8[32768]{0}', space=vmem, size = 0x8000, scoped, tag = 'input window, operand 3, single buffered']
    %10 = vsyncpa [#allocation3], 0
    %11 = vsyncpa [#allocation5], 0
    // Predicated region
    $region2: #{target_critic_forward.1} parent=1 // pred_check
      _
    $region3: #{target_critic_forward.1} parent=1 // pred_check_branch
      %13 = sbr.rel (0) target = $region5
    $region4: #{target_critic_forward.1} parent=1 // pred_region
      _
    $region5: #{target_critic_forward.1} parent=1 // pred_fallthru
      _
    // Predicated region
    $region6: #{target_critic_forward.1} parent=1 // pred_check
      _
    $region7: #{target_critic_forward.1} parent=1 // pred_check_branch
      %15 = sbr.rel (0) target = $region9
    $region8: #{target_critic_forward.1} parent=1 // pred_region
      %s17 = ssub.s32 1024, 1024
      %18 = vsyncadd [#allocation3], %s17
      %s19 = sshll.u32 [#allocation2], 4
      %s20 = int_to_ptr.vmem [resolvable:$true] %s19
      %25 = dma.hbm_to_vmem [thread:$0]  %s1, 1024, %s20, [#allocation3], 64, 64, 4
    $region9: #{target_critic_forward.1} parent=1 // pred_fallthru
      _
    // Predicated region
    $region10: #{target_critic_forward.1} parent=1 // pred_check
      _
    $region11: #{target_critic_forward.1} parent=1 // pred_check_branch
      %27 = sbr.rel (0) target = $region13
    $region12: #{target_critic_forward.1} parent=1 // pred_region
      %s29 = ssub.s32 1024, 1024
      %30 = vsyncadd [#allocation5], %s29
      %s31 = sshll.u32 [#allocation4], 4
      %s32 = int_to_ptr.vmem [resolvable:$true] %s31
      %37 = dma.hbm_to_vmem [thread:$0]  %s2, 1024, %s32, [#allocation5], 64, 64, 4
    $region13: #{target_critic_forward.1} parent=1 // pred_fallthru
      _
    // Predicated region
    $region14: #{target_critic_forward.1} parent=1 // pred_check
      _
    $region15: #{target_critic_forward.1} parent=1 // pred_check_branch
      %39 = sbr.rel (0) target = $region17
    $region16: #{target_critic_forward.1} parent=1 // pred_region
      %s41 = ssub.s32 1024, 1024
      %42 = vsyncadd [#allocation5], %s41
      %s43 = sshll.u32 [#allocation6], 4
      %s44 = int_to_ptr.vmem [resolvable:$true] %s43
      %49 = dma.hbm_to_vmem [thread:$0]  %s3, 1024, %s44, [#allocation5], 64, 64, 4
    $region17: #{target_critic_forward.1} parent=1 // pred_fallthru
      _
    // Predicated region
    $region18: #{target_critic_forward.1} parent=1 // pred_check
      _
    $region19: #{target_critic_forward.1} parent=1 // pred_check_branch
      %51 = sbr.rel (0) target = $region21
    $region20: #{target_critic_forward.1} parent=1 // pred_region
      _
    $region21: #{target_critic_forward.1} parent=1 // pred_fallthru
      _
    // Predicated region
    $region22: #{target_critic_forward.1} parent=1 // pred_check
      _
    $region23: #{target_critic_forward.1} parent=1 // pred_check_branch
      %53 = sbr.rel (0) target = $region25
    $region24: #{target_critic_forward.1} parent=1 // pred_region
      %54 = dma.done [#allocation3], 1024
    $region25: #{target_critic_forward.1} parent=1 // pred_fallthru
      _
    // Predicated region
    $region26: #{target_critic_forward.1} parent=1 // pred_check
      _
    $region27: #{target_critic_forward.1} parent=1 // pred_check_branch
      %56 = sbr.rel (0) target = $region29
    $region28: #{target_critic_forward.1} parent=1 // pred_region
      %57 = dma.done [#allocation5], 1024
    $region29: #{target_critic_forward.1} parent=1 // pred_fallthru
      _
    // Predicated region
    $region30: #{target_critic_forward.1} parent=1 // pred_check
      _
    $region31: #{target_critic_forward.1} parent=1 // pred_check_branch
      %59 = sbr.rel (0) target = $region33
    $region32: #{target_critic_forward.1} parent=1 // pred_region
      %60 = dma.done [#allocation5], 1024
    $region33: #{target_critic_forward.1} parent=1 // pred_fallthru
      _
    %v62 = vld [vmem:[%s4] sm:$0x1]
    %v63 = vld [vmem:[%s4 + $0x1] sm:$0x1]
    %v64 = vld [vmem:[%s4 + $0x2] sm:$0x1]
    %v65 = vld [vmem:[%s4 + $0x3] sm:$0x1]
    %v66 = vld [vmem:[%s4 + $0x4] sm:$0x1]
    %v67 = vld [vmem:[%s4 + $0x5] sm:$0x1]
    %v68 = vld [vmem:[%s4 + $0x6] sm:$0x1]
    %v69 = vld [vmem:[%s4 + $0x7] sm:$0x1]
    %v70 = vld [vmem:[%s0] sm:$0xf]
    %v71 = vld [vmem:[#allocation2] sm:$0xf]
    %v72 = vld [vmem:[#allocation2 + $0x4] sm:$0xf]
    %v73 = vld [vmem:[#allocation2 + $0x8] sm:$0xf]
    %v74 = vld [vmem:[#allocation2 + $0xc] sm:$0xf]
    %v75 = vld [vmem:[#allocation2 + $0x10] sm:$0xf]
    %v76 = vld [vmem:[#allocation2 + $0x14] sm:$0xf]
    %v77 = vld [vmem:[#allocation2 + $0x18] sm:$0xf]
    %v78 = vld [vmem:[#allocation2 + $0x1c] sm:$0xf]
    %v79 = vld [vmem:[#allocation2 + $0x20] sm:$0xf]
    %v80 = vld [vmem:[#allocation2 + $0x24] sm:$0xf]
    %v81 = vld [vmem:[#allocation2 + $0x28] sm:$0xf]
    %v82 = vld [vmem:[#allocation2 + $0x2c] sm:$0xf]
    %v83 = vld [vmem:[#allocation2 + $0x30] sm:$0xf]
    %v84 = vld [vmem:[#allocation2 + $0x34] sm:$0xf]
    %v85 = vld [vmem:[#allocation2 + $0x38] sm:$0xf]
    %v86 = vld [vmem:[#allocation2 + $0x3c] sm:$0xf]
    %v87 = vlaneseq
    %v88 = vshrl.u32 %v87, 7
    %v89 = vsub.s32 0, %v88
    %v90 = vrot.slane %v62, %v89
    %v107 = vunpack.c.l.b16 %v71
    %v108 = vunpack.c.l.b16 %v72
    %v109 = vunpack.c.l.b16 %v73
    %v110 = vunpack.c.l.b16 %v74
    %v111 = vunpack.c.l.b16 %v75
    %v112 = vunpack.c.l.b16 %v76
    %v113 = vunpack.c.l.b16 %v77
    %v114 = vunpack.c.l.b16 %v78
    %v115 = vunpack.c.l.b16 %v79
    %v116 = vunpack.c.l.b16 %v80
    %v117 = vunpack.c.l.b16 %v81
    %v118 = vunpack.c.l.b16 %v82
    %v119 = vunpack.c.l.b16 %v83
    %v120 = vunpack.c.l.b16 %v84
    %v121 = vunpack.c.l.b16 %v85
    %v122 = vunpack.c.l.b16 %v86
    %v123 = vpack.c.b16 %v108, %v107
    %v124 = vpack.c.b16 %v110, %v109
    %v125 = vpack.c.b16 %v112, %v111
    %v126 = vpack.c.b16 %v114, %v113
    %v127 = vpack.c.b16 %v116, %v115
    %v128 = vpack.c.b16 %v118, %v117
    %v129 = vpack.c.b16 %v120, %v119
    %v130 = vpack.c.b16 %v122, %v121
    %139 = vmatprep.subr.bf16.mxu0 0
    %140 = vmatpush1.bf16.msra.mxu0 %v123
    %141 = vmatprep.subr.bf16.mxu0 0
    %142 = vmatpush1.bf16.msra.mxu0 %v124
    %143 = vmatprep.subr.bf16.mxu0 0
    %144 = vmatpush1.bf16.msra.mxu0 %v125
    %145 = vmatprep.subr.bf16.mxu0 0
    %146 = vmatpush1.bf16.msra.mxu0 %v126
    %147 = vmatprep.subr.bf16.mxu0 0
    %148 = vmatpush1.bf16.msra.mxu0 %v127
    %149 = vmatprep.subr.bf16.mxu0 0
    %150 = vmatpush1.bf16.msra.mxu0 %v128
    %151 = vmatprep.subr.bf16.mxu0 0
    %152 = vmatpush1.bf16.msra.mxu0 %v129
    %153 = vmatprep.subr.bf16.mxu0 0
    %154 = vmatpush1.bf16.msra.mxu0 %v130
    %155 = vmatprep.subr.bf16.mxu0 0
    %156 = vmatpush1.bf16.msra.mxu0 0
    %157 = vmatprep.subr.bf16.mxu0 0
    %158 = vmatpush1.bf16.msra.mxu0 0
    %159 = vmatprep.subr.bf16.mxu0 0
    %160 = vmatpush1.bf16.msra.mxu0 0
    %161 = vmatprep.subr.bf16.mxu0 0
    %162 = vmatpush1.bf16.msra.mxu0 0
    %163 = vmatprep.subr.bf16.mxu0 0
    %164 = vmatpush1.bf16.msra.mxu0 0
    %165 = vmatprep.subr.bf16.mxu0 0
    %166 = vmatpush1.bf16.msra.mxu0 0
    %167 = vmatprep.subr.bf16.mxu0 0
    %168 = vmatpush1.bf16.msra.mxu0 0
    %169 = vmatprep.subr.bf16.mxu0 0
    %170 = vmatpush1.bf16.msra.mxu0 0
    %171 = vmatprep.mubr.bf16.mxu0 0
    %172 = vmatmul.mubr.bf16.gmra.mrb[0].mxu0 %v70
    %v173 = vpop.f32.mrb[0].mxu0
    %v174 = vadd.f32 %v90, %v173
    %v175 = vpop.f32.mrb[0].mxu0
    %v176 = vpop.f32.mrb[0].mxu0
    %v177 = vpop.f32.mrb[0].mxu0
    %178 = vdwg.mxu0
    %v179 = vmax.f32 %v174, 0.0
    %180 = vadd.xlane.f32.xlu0 %v179
    %v181 = vpop.xlane.xlu0 %180
    %v182 = vmul.f32 %v179, %v179
    %183 = vadd.xlane.f32.xlu0 %v182
    %v184 = vpop.xlane.xlu0 %183
    %v185 = vmul.f32 %v181, 0.01
    %v186 = vmul.f32 %v184, 0.01
    %v187 = vmul.f32 %v185, %v185
    %v188 = vsub.f32 %v186, %v187
    %v189 = vsub.f32 %v179, %v185
    %v190 = vadd.f32 %v188, 1e-05
    %v191 = vrsqrt.pop %v190
    %v192 = vmul.f32 %v189, %v191
    %v193 = vlaneseq
    %v194 = vshrl.u32 %v193, 7
    %v195 = vsub.s32 0, %v194
    %v196 = vrot.slane %v63, %v195
    %v197 = vmul.f32 %v192, %v196
    %v198 = vlaneseq
    %v199 = vshrl.u32 %v198, 7
    %v200 = vsub.s32 0, %v199
    %v201 = vrot.slane %v64, %v200
    %v202 = vadd.f32 %v197, %v201
    %v203 = vpack.c.bf16 %v202, %v202
    %v204 = vld [vmem:[#allocation4] sm:$0xf]
    %v205 = vld [vmem:[#allocation4 + $0x4] sm:$0xf]
    %v206 = vld [vmem:[#allocation4 + $0x8] sm:$0xf]
    %v207 = vld [vmem:[#allocation4 + $0xc] sm:$0xf]
    %v208 = vld [vmem:[#allocation4 + $0x10] sm:$0xf]
    %v209 = vld [vmem:[#allocation4 + $0x14] sm:$0xf]
    %v210 = vld [vmem:[#allocation4 + $0x18] sm:$0xf]
    %v211 = vld [vmem:[#allocation4 + $0x1c] sm:$0xf]
    %v212 = vld [vmem:[#allocation4 + $0x20] sm:$0xf]
    %v213 = vld [vmem:[#allocation4 + $0x24] sm:$0xf]
    %v214 = vld [vmem:[#allocation4 + $0x28] sm:$0xf]
    %v215 = vld [vmem:[#allocation4 + $0x2c] sm:$0xf]
    %v216 = vld [vmem:[#allocation4 + $0x30] sm:$0xf]
    %v217 = vld [vmem:[#allocation4 + $0x34] sm:$0xf]
    %v218 = vld [vmem:[#allocation4 + $0x38] sm:$0xf]
    %v219 = vld [vmem:[#allocation4 + $0x3c] sm:$0xf]
    %v220 = vld [vmem:[#allocation6] sm:$0xf]
    %v221 = vld [vmem:[#allocation6 + $0x4] sm:$0xf]
    %v222 = vld [vmem:[#allocation6 + $0x8] sm:$0xf]
    %v223 = vld [vmem:[#allocation6 + $0xc] sm:$0xf]
    %v224 = vld [vmem:[#allocation6 + $0x10] sm:$0xf]
    %v225 = vld [vmem:[#allocation6 + $0x14] sm:$0xf]
    %v226 = vld [vmem:[#allocation6 + $0x18] sm:$0xf]
    %v227 = vld [vmem:[#allocation6 + $0x1c] sm:$0xf]
    %v228 = vld [vmem:[#allocation6 + $0x20] sm:$0xf]
    %v229 = vld [vmem:[#allocation6 + $0x24] sm:$0xf]
    %v230 = vld [vmem:[#allocation6 + $0x28] sm:$0xf]
    %v231 = vld [vmem:[#allocation6 + $0x2c] sm:$0xf]
    %v232 = vld [vmem:[#allocation6 + $0x30] sm:$0xf]
    %v233 = vld [vmem:[#allocation6 + $0x34] sm:$0xf]
    %v234 = vld [vmem:[#allocation6 + $0x38] sm:$0xf]
    %v235 = vld [vmem:[#allocation6 + $0x3c] sm:$0xf]
    %v252 = vunpack.c.l.b16 %v220
    %v253 = vunpack.c.l.b16 %v221
    %v254 = vunpack.c.l.b16 %v222
    %v255 = vunpack.c.l.b16 %v223
    %v256 = vunpack.c.l.b16 %v224
    %v257 = vunpack.c.l.b16 %v225
    %v258 = vunpack.c.l.b16 %v226
    %v259 = vunpack.c.l.b16 %v227
    %v260 = vunpack.c.l.b16 %v228
    %v261 = vunpack.c.l.b16 %v229
    %v262 = vunpack.c.l.b16 %v230
    %v263 = vunpack.c.l.b16 %v231
    %v264 = vunpack.c.l.b16 %v232
    %v265 = vunpack.c.l.b16 %v233
    %v266 = vunpack.c.l.b16 %v234
    %v267 = vunpack.c.l.b16 %v235
    %v268 = vpack.c.b16 %v253, %v252
    %v269 = vpack.c.b16 %v255, %v254
    %v270 = vpack.c.b16 %v257, %v256
    %v271 = vpack.c.b16 %v259, %v258
    %v272 = vpack.c.b16 %v261, %v260
    %v273 = vpack.c.b16 %v263, %v262
    %v274 = vpack.c.b16 %v265, %v264
    %v275 = vpack.c.b16 %v267, %v266
    %284 = vmatprep.subr.bf16.mxu0 0
    %285 = vmatpush1.bf16.msra.mxu0 %v268
    %286 = vmatprep.subr.bf16.mxu0 0
    %287 = vmatpush1.bf16.msra.mxu0 %v269
    %288 = vmatprep.subr.bf16.mxu0 0
    %289 = vmatpush1.bf16.msra.mxu0 %v270
    %290 = vmatprep.subr.bf16.mxu0 0
    %291 = vmatpush1.bf16.msra.mxu0 %v271
    %292 = vmatprep.subr.bf16.mxu0 0
    %293 = vmatpush1.bf16.msra.mxu0 %v272
    %294 = vmatprep.subr.bf16.mxu0 0
    %295 = vmatpush1.bf16.msra.mxu0 %v273
    %296 = vmatprep.subr.bf16.mxu0 0
    %297 = vmatpush1.bf16.msra.mxu0 %v274
    %298 = vmatprep.subr.bf16.mxu0 0
    %299 = vmatpush1.bf16.msra.mxu0 %v275
    %300 = vmatprep.subr.bf16.mxu0 0
    %301 = vmatpush1.bf16.msra.mxu0 0
    %302 = vmatprep.subr.bf16.mxu0 0
    %303 = vmatpush1.bf16.msra.mxu0 0
    %304 = vmatprep.subr.bf16.mxu0 0
    %305 = vmatpush1.bf16.msra.mxu0 0
    %306 = vmatprep.subr.bf16.mxu0 0
    %307 = vmatpush1.bf16.msra.mxu0 0
    %308 = vmatprep.subr.bf16.mxu0 0
    %309 = vmatpush1.bf16.msra.mxu0 0
    %310 = vmatprep.subr.bf16.mxu0 0
    %311 = vmatpush1.bf16.msra.mxu0 0
    %312 = vmatprep.subr.bf16.mxu0 0
    %313 = vmatpush1.bf16.msra.mxu0 0
    %314 = vmatprep.subr.bf16.mxu0 0
    %315 = vmatpush1.bf16.msra.mxu0 0
    %316 = vmatprep.mubr.bf16.mxu0 0
    %317 = vmatmul.mubr.bf16.gmra.mrb[0].mxu0 %v70
    %v318 = vpop.f32.mrb[0].mxu0
    %v319 = vadd.f32 0.0, %v318
    %v320 = vpop.f32.mrb[0].mxu0
    %v321 = vpop.f32.mrb[0].mxu0
    %v322 = vpop.f32.mrb[0].mxu0
    %323 = vdwg.mxu0
    %v340 = vunpack.c.l.b16 %v204
    %v341 = vunpack.c.l.b16 %v205
    %v342 = vunpack.c.l.b16 %v206
    %v343 = vunpack.c.l.b16 %v207
    %v344 = vunpack.c.l.b16 %v208
    %v345 = vunpack.c.l.b16 %v209
    %v346 = vunpack.c.l.b16 %v210
    %v347 = vunpack.c.l.b16 %v211
    %v348 = vunpack.c.l.b16 %v212
    %v349 = vunpack.c.l.b16 %v213
    %v350 = vunpack.c.l.b16 %v214
    %v351 = vunpack.c.l.b16 %v215
    %v352 = vunpack.c.l.b16 %v216
    %v353 = vunpack.c.l.b16 %v217
    %v354 = vunpack.c.l.b16 %v218
    %v355 = vunpack.c.l.b16 %v219
    %v356 = vpack.c.b16 %v341, %v340
    %v357 = vpack.c.b16 %v343, %v342
    %v358 = vpack.c.b16 %v345, %v344
    %v359 = vpack.c.b16 %v347, %v346
    %v360 = vpack.c.b16 %v349, %v348
    %v361 = vpack.c.b16 %v351, %v350
    %v362 = vpack.c.b16 %v353, %v352
    %v363 = vpack.c.b16 %v355, %v354
    %372 = vmatprep.subr.bf16.mxu0 0
    %373 = vmatpush1.bf16.msra.mxu0 %v356
    %374 = vmatprep.subr.bf16.mxu0 0
    %375 = vmatpush1.bf16.msra.mxu0 %v357
    %376 = vmatprep.subr.bf16.mxu0 0
    %377 = vmatpush1.bf16.msra.mxu0 %v358
    %378 = vmatprep.subr.bf16.mxu0 0
    %379 = vmatpush1.bf16.msra.mxu0 %v359
    %380 = vmatprep.subr.bf16.mxu0 0
    %381 = vmatpush1.bf16.msra.mxu0 %v360
    %382 = vmatprep.subr.bf16.mxu0 0
    %383 = vmatpush1.bf16.msra.mxu0 %v361
    %384 = vmatprep.subr.bf16.mxu0 0
    %385 = vmatpush1.bf16.msra.mxu0 %v362
    %386 = vmatprep.subr.bf16.mxu0 0
    %387 = vmatpush1.bf16.msra.mxu0 %v363
    %388 = vmatprep.subr.bf16.mxu0 0
    %389 = vmatpush1.bf16.msra.mxu0 0
    %390 = vmatprep.subr.bf16.mxu0 0
    %391 = vmatpush1.bf16.msra.mxu0 0
    %392 = vmatprep.subr.bf16.mxu0 0
    %393 = vmatpush1.bf16.msra.mxu0 0
    %394 = vmatprep.subr.bf16.mxu0 0
    %395 = vmatpush1.bf16.msra.mxu0 0
    %396 = vmatprep.subr.bf16.mxu0 0
    %397 = vmatpush1.bf16.msra.mxu0 0
    %398 = vmatprep.subr.bf16.mxu0 0
    %399 = vmatpush1.bf16.msra.mxu0 0
    %400 = vmatprep.subr.bf16.mxu0 0
    %401 = vmatpush1.bf16.msra.mxu0 0
    %402 = vmatprep.subr.bf16.mxu0 0
    %403 = vmatpush1.bf16.msra.mxu0 0
    %404 = vmatprep.mubr.bf16.mxu0 0
    %405 = vmatmul.mubr.bf16.gmra.mrb[0].mxu0 %v203
    %v406 = vpop.f32.mrb[0].mxu0
    %v407 = vadd.f32 %v319, %v406
    %v408 = vpop.f32.mrb[0].mxu0
    %v409 = vpop.f32.mrb[0].mxu0
    %v410 = vpop.f32.mrb[0].mxu0
    %411 = vdwg.mxu0
    %v412 = vlaneseq
    %v413 = vshrl.u32 %v412, 7
    %v414 = vsub.s32 0, %v413
    %v415 = vrot.slane %v65, %v414
    %v416 = vadd.f32 %v407, %v415
    %v417 = vmax.f32 %v416, 0.0
    %418 = vadd.xlane.f32.xlu0 %v417
    %v419 = vpop.xlane.xlu0 %418
    %v420 = vmul.f32 %v417, %v417
    %421 = vadd.xlane.f32.xlu0 %v420
    %v422 = vpop.xlane.xlu0 %421
    %v423 = vmul.f32 %v419, 0.013888889
    %v424 = vmul.f32 %v422, 0.013888889
    %v425 = vmul.f32 %v423, %v423
    %v426 = vsub.f32 %v424, %v425
    %v427 = vsub.f32 %v417, %v423
    %v428 = vadd.f32 %v426, 1e-05
    %v429 = vrsqrt.pop %v428
    %v430 = vmul.f32 %v427, %v429
    %v431 = vlaneseq
    %v432 = vshrl.u32 %v431, 7
    %v433 = vsub.s32 0, %v432
    %v434 = vrot.slane %v66, %v433
    %v435 = vmul.f32 %v430, %v434
    %v436 = vlaneseq
    %v437 = vshrl.u32 %v436, 7
    %v438 = vsub.s32 0, %v437
    %v439 = vrot.slane %v67, %v438
    %v440 = vadd.f32 %v435, %v439
    %v441 = vlaneseq
    %v442 = vshrl.u32 %v441, 7
    %v443 = vsub.s32 0, %v442
    %v444 = vrot.slane %v68, %v443
    %v445 = vmul.f32 %v440, %v444
    %446 = vadd.xlane.f32.xlu0 %v445
    %v447 = vpop.xlane.xlu0 %446
    %v448 = vlaneseq
    %v449 = vshrl.u32 %v448, 7
    %v450 = vsub.s32 0, %v449
    %v451 = vrot.slane %v69, %v450
    %v452 = vadd.f32 %v447, %v451
    %vm453 = vcmask 7168
    %454 = vst.msk [vmem:[%s5] sm:$0xff] %vm453, %v452
    // Predicated region
    $region34: #{target_critic_forward.1} parent=1 // pred_check
      _
    $region35: #{target_critic_forward.1} parent=1 // pred_check_branch
      %456 = sbr.rel (0) target = $region37
    $region36: #{target_critic_forward.1} parent=1 // pred_region
      _
    $region37: #{target_critic_forward.1} parent=1 // pred_fallthru
      _
    // Predicated region
    $region38: #{target_critic_forward.1} parent=1 // pred_check
      _
    $region39: #{target_critic_forward.1} parent=1 // pred_check_branch
      %458 = sbr.rel (0) target = $region41
    $region40: #{target_critic_forward.1} parent=1 // pred_region
      _
    $region41: #{target_critic_forward.1} parent=1 // pred_fallthru
      _
    %459 = vsyncpa [#allocation3], 1
    %460 = vsyncpa [#allocation5], 1

</llo_original>
